<compile_context>
chip_gen: v7x
topology: tpu7x:2x2x1
jax: 0.10.0
libtpu: 0.0.40
codegen_flags: <defaults>
</compile_context>

<pallas_src>
import functools

import jax
import jax.numpy as jnp
from jax import lax
from jax.experimental import pallas as pl
from jax.experimental.pallas import tpu as pltpu


def _recip_nr(x):
    """EUP approx reciprocal + one Newton-Raphson step (~1e-8 rel error).

    Keeps the full-tile / lane-dense divides on the (otherwise idle) EUP slot
    instead of the VPU while staying well inside the 1e-5 tolerance.
    """
    y = pl.reciprocal(x, approx=True)
    return y * (2.0 - x * y)


def _q0_kernel(x_ref, c_ref, q0t_ref, s0_ref, *, exact):
    """Pass 1: Student-t kernel q0^T = 1/(1 + d2^T) and colsum_n(q0)."""
    i = pl.program_id(0)
    x = x_ref[...].astype(jnp.float32)            # (bn, D)
    c = c_ref[...].astype(jnp.float32)            # (K, D)
    K, D = c.shape

    ones = jnp.ones((1, D), jnp.float32)
    if exact:
        # Direct squared differences (no cancellation), one cluster at a time:
        # only (bn, D) is live (no (N, K, D) intermediate), and the ones-dot
        # reduction lands each distance row directly lane-dense as (1, bn).
        rows = []
        for k in range(K):                        # K is static -> unrolled
            diff = x - c[k:k + 1, :]              # (bn, D)
            rows.append(
                lax.dot_general(ones, diff * diff,
                                (((1,), (1,)), ((), ())),
                                preferred_element_type=jnp.float32))   # (1, bn)
        d2t = jnp.concatenate(rows, axis=0)       # (K, bn)
    else:
        # Rank-1 expansion on the MXU for large K*D.
        # TODO(synk): optionally cast the c.x matmul to bf16 (~3-6x MXU
        # throughput) once re-validated against the 1e-5 tolerance.
        c2 = jnp.sum(c * c, axis=1, keepdims=True)                      # (K, 1)
        x2 = lax.dot_general(ones, x * x, (((1,), (1,)), ((), ())),
                             preferred_element_type=jnp.float32)        # (1, bn)
        cx = lax.dot_general(c, x, (((1,), (1,)), ((), ())),
                             preferred_element_type=jnp.float32)        # (K, bn)
        # Clamp: cancellation can push tiny distances slightly negative.
        d2t = jnp.maximum(c2 + x2 - 2.0 * cx, 0.0)

    q0t = _recip_nr(1.0 + d2t)                    # (K, bn), lane-dense
    q0t_ref[...] = q0t

    @pl.when(i == 0)
    def _():
        s0_ref[...] = jnp.zeros_like(s0_ref)

    s0_ref[...] += jnp.sum(q0t, axis=1, keepdims=True)   # accumulate over N tiles


def _normalize_kernel(yt_ref, s_ref, out_ref, colsum_ref):
    """Shared pass 2/3: t = row_norm(y^2 / colsum_n(y)) plus colsum_n(t).

    Pass 2: y = q0, s = sum_n q0  -> t = q,  colsum_out = sum_n q
    Pass 3: y = q,  s = sum_n q   -> t = p,  colsum_out unused
    """
    i = pl.program_id(0)
    y = yt_ref[...]                               # (K, bn)
    inv_col = pl.reciprocal(s_ref[...])           # (K, 1): tiny, keep exact
    t = (y * y) * inv_col                         # (K, bn)
    inv_row = _recip_nr(jnp.sum(t, axis=0, keepdims=True))   # (1, bn)
    t = t * inv_row
    out_ref[...] = t

    @pl.when(i == 0)
    def _():
        colsum_ref[...] = jnp.zeros_like(colsum_ref)

    colsum_ref[...] += jnp.sum(t, axis=1, keepdims=True)


def _pick_block_n(n, d):
    # Largest batch tile that (a) divides N and (b) keeps the double-buffered
    # x tile well under every generation's scoped-VMEM default (v5e's 16 MiB
    # is the tightest; v7x only has 64 MiB physical per TensorCore), so no
    # vmem_limit_bytes override is needed.
    budget_bytes = 4 << 20
    for bn in (1024, 512, 256, 128):
        if n % bn == 0 and bn * d * 4 <= budget_bytes:
            return bn
    # Small or ragged batch: whole batch in one tile.
    # TODO(synk): pad + mask the trailing tile for large ragged N.
    return n


def clustering_layer_forward(x, clusters, *, block_n=None, exact_distance=None,
                             transposed_outputs=False):
    """x: (N, D) f32, clusters: (K, D) f32 -> (q, p), each (N, K) f32.

    transposed_outputs=True returns (K, N) arrays and skips the final
    un-transpose (useful when the downstream KL loss can consume them as-is).
    """
    x = jnp.asarray(x, jnp.float32)
    clusters = jnp.asarray(clusters, jnp.float32)
    N, D = x.shape
    K, D2 = clusters.shape
    assert D == D2, "Input tensor feature dim must match cluster dim."

    if exact_distance is None:
        # Exact direct-difference distances while the unrolled K-loop is cheap;
        # switch to the rank-1 MXU matmul once K*D makes it the binding cost
        # (its cancellation is then bounded by the max(., 0) clamp).
        exact_distance = (K * D <= 4096) and (K <= 32)

    bn = _pick_block_n(N, D) if block_n is None else block_n
    assert N % bn == 0, "block_n must divide N"
    grid = (N // bn,)

    # N axis is "arbitrary": the (K, 1) column-sum accumulators are carried
    # sequentially across tiles.  TODO(synk): per-core partial column sums +
    # a combine step so this can be "parallel" and use both v7x TensorCores.
    params = pltpu.CompilerParams(dimension_semantics=("arbitrary",))

    kn_spec = pl.BlockSpec((K, bn), lambda i: (0, i))
    colsum_spec = pl.BlockSpec((K, 1), lambda i: (0, 0))
    kn_shape = jax.ShapeDtypeStruct((K, N), jnp.float32)
    colsum_shape = jax.ShapeDtypeStruct((K, 1), jnp.float32)

    # Pass 1: q0^T and colsum_n(q0).
    q0t, s0 = pl.pallas_call(
        functools.partial(_q0_kernel, exact=exact_distance),
        grid=grid,
        in_specs=[pl.BlockSpec((bn, D), lambda i: (i, 0)),
                  pl.BlockSpec((K, D), lambda i: (0, 0))],
        out_specs=(kn_spec, colsum_spec),
        out_shape=(kn_shape, colsum_shape),
        compiler_params=params,
    )(x, clusters)

    # Pass 2: q^T and colsum_n(q).
    qt, sq = pl.pallas_call(
        _normalize_kernel,
        grid=grid,
        in_specs=[kn_spec, colsum_spec],
        out_specs=(kn_shape and kn_spec, colsum_spec),
        out_shape=(kn_shape, colsum_shape),
        compiler_params=params,
    )(q0t, s0)

    # Pass 3: p^T (its trailing column-sum output is unused).
    pt, _ = pl.pallas_call(
        _normalize_kernel,
        grid=grid,
        in_specs=[kn_spec, colsum_spec],
        out_specs=(kn_spec, colsum_spec),
        out_shape=(kn_shape, colsum_shape),
        compiler_params=params,
    )(qt, sq)

    if transposed_outputs:
        return qt, pt
    # Un-transpose in the wrapper (plain XLA transpose over 2*N*K*4 bytes);
    # downstream consumers that accept (K, N) should use transposed_outputs.
    return qt.T, pt.T


def _reference(x, clusters):
    # Pure-JAX reference matching the PyTorch module line by line.
    d2 = jnp.sum((x[:, None, :] - clusters[None, :, :]) ** 2, axis=2)
    q = 1.0 / (1.0 + d2 / 1.0)
    q = q ** 2 / q.sum(0)
    q = (q.T / q.sum(1)).T
    p = q ** 2 / q.sum(0)
    p = (p.T / p.sum(1)).T
    return q, p


if __name__ == "__main__":
    # Module config: n_clusters=8, input_dim=32; batch of 16 samples.
    N, D, K = 16, 32, 8

    key = jax.random.PRNGKey(0)
    kx, kc = jax.random.split(key)
    x = jax.random.normal(kx, (N, D), dtype=jnp.float32)
    # Deterministic stand-in for nn.Parameter(torch.randn(n_clusters, input_dim)).
    clusters = jax.random.normal(kc, (K, D), dtype=jnp.float32)

    q, p = clustering_layer_forward(x, clusters)
    q = jax.block_until_ready(q)
    p = jax.block_until_ready(p)

    q_ref, p_ref = _reference(x, clusters)
    assert q.shape == (N, K) and p.shape == (N, K)
    assert jnp.allclose(q, q_ref, rtol=1e-5, atol=1e-5), "q mismatch"
    assert jnp.allclose(p, p_ref, rtol=1e-5, atol=1e-5), "p mismatch"

    print("KERNEL_OK")
</pallas_src>

<mosaic_0001>
module attributes {stable_mosaic.version = 11 : i64} {
  func.func @_q0_kernel(%arg0: i32, %arg1: memref<16x32xf32, #tpu.memory_space<vmem>>, %arg2: memref<8x32xf32, #tpu.memory_space<vmem>>, %arg3: memref<8x16xf32, #tpu.memory_space<vmem>>, %arg4: memref<8x1xf32, #tpu.memory_space<vmem>>) attributes {dimension_semantics = [#tpu.dimension_semantics<arbitrary>], iteration_bounds = array<i64: 1>, scalar_prefetch = 0 : i64, scratch_operands = 0 : i64, tpu.core_type = #tpu.core_type<tc>, window_params = [{transform_indices = @transform_0, window_bounds = array<i64: 16, 32>}, {pipeline_mode = #tpu.pipeline_mode<synchronous>, transform_indices = @transform_1, window_bounds = array<i64: 8, 32>}, {transform_indices = @transform_2, window_bounds = array<i64: 8, 16>}, {pipeline_mode = #tpu.pipeline_mode<synchronous>, transform_indices = @transform_3, window_bounds = array<i64: 8, 1>}]} {
    %c0 = arith.constant 0 : index
    %c0_0 = arith.constant 0 : index
    %0 = vector.load %arg1[%c0, %c0_0] : memref<16x32xf32, #tpu.memory_space<vmem>>, vector<16x32xf32>
    %c0_1 = arith.constant 0 : index
    %c0_2 = arith.constant 0 : index
    %1 = vector.load %arg2[%c0_1, %c0_2] : memref<8x32xf32, #tpu.memory_space<vmem>>, vector<8x32xf32>
    %cst = arith.constant 1.000000e+00 : f32
    %2 = vector.broadcast %cst : f32 to vector<1x32xf32>
    %3 = vector.extract_strided_slice %1 {offsets = [0, 0], sizes = [1, 32], strides = [1, 1]} : vector<8x32xf32> to vector<1x32xf32>
    %4 = vector.broadcast %3 : vector<1x32xf32> to vector<16x32xf32>
    %5 = arith.subf %0, %4 : vector<16x32xf32>
    %6 = arith.mulf %5, %5 : vector<16x32xf32>
    %cst_3 = arith.constant dense<0.000000e+00> : vector<1x16xf32>
    %7 = tpu.matmul %2, %6, %cst_3 {dimension_numbers = #tpu.dot_dimension_numbers<[1], [1], [0], [0], [0, 0, 1, 0], [], []>} : vector<1x32xf32>, vector<16x32xf32>, vector<1x16xf32> -> vector<1x16xf32>
    %8 = vector.extract_strided_slice %1 {offsets = [1, 0], sizes = [1, 32], strides = [1, 1]} : vector<8x32xf32> to vector<1x32xf32>
    %9 = vector.broadcast %8 : vector<1x32xf32> to vector<16x32xf32>
    %10 = arith.subf %0, %9 : vector<16x32xf32>
    %11 = arith.mulf %10, %10 : vector<16x32xf32>
    %cst_4 = arith.constant dense<0.000000e+00> : vector<1x16xf32>
    %12 = tpu.matmul %2, %11, %cst_4 {dimension_numbers = #tpu.dot_dimension_numbers<[1], [1], [0], [0], [0, 0, 1, 0], [], []>} : vector<1x32xf32>, vector<16x32xf32>, vector<1x16xf32> -> vector<1x16xf32>
    %13 = vector.extract_strided_slice %1 {offsets = [2, 0], sizes = [1, 32], strides = [1, 1]} : vector<8x32xf32> to vector<1x32xf32>
    %14 = vector.broadcast %13 : vector<1x32xf32> to vector<16x32xf32>
    %15 = arith.subf %0, %14 : vector<16x32xf32>
    %16 = arith.mulf %15, %15 : vector<16x32xf32>
    %cst_5 = arith.constant dense<0.000000e+00> : vector<1x16xf32>
    %17 = tpu.matmul %2, %16, %cst_5 {dimension_numbers = #tpu.dot_dimension_numbers<[1], [1], [0], [0], [0, 0, 1, 0], [], []>} : vector<1x32xf32>, vector<16x32xf32>, vector<1x16xf32> -> vector<1x16xf32>
    %18 = vector.extract_strided_slice %1 {offsets = [3, 0], sizes = [1, 32], strides = [1, 1]} : vector<8x32xf32> to vector<1x32xf32>
    %19 = vector.broadcast %18 : vector<1x32xf32> to vector<16x32xf32>
    %20 = arith.subf %0, %19 : vector<16x32xf32>
    %21 = arith.mulf %20, %20 : vector<16x32xf32>
    %cst_6 = arith.constant dense<0.000000e+00> : vector<1x16xf32>
    %22 = tpu.matmul %2, %21, %cst_6 {dimension_numbers = #tpu.dot_dimension_numbers<[1], [1], [0], [0], [0, 0, 1, 0], [], []>} : vector<1x32xf32>, vector<16x32xf32>, vector<1x16xf32> -> vector<1x16xf32>
    %23 = vector.extract_strided_slice %1 {offsets = [4, 0], sizes = [1, 32], strides = [1, 1]} : vector<8x32xf32> to vector<1x32xf32>
    %24 = vector.broadcast %23 : vector<1x32xf32> to vector<16x32xf32>
    %25 = arith.subf %0, %24 : vector<16x32xf32>
    %26 = arith.mulf %25, %25 : vector<16x32xf32>
    %cst_7 = arith.constant dense<0.000000e+00> : vector<1x16xf32>
    %27 = tpu.matmul %2, %26, %cst_7 {dimension_numbers = #tpu.dot_dimension_numbers<[1], [1], [0], [0], [0, 0, 1, 0], [], []>} : vector<1x32xf32>, vector<16x32xf32>, vector<1x16xf32> -> vector<1x16xf32>
    %28 = vector.extract_strided_slice %1 {offsets = [5, 0], sizes = [1, 32], strides = [1, 1]} : vector<8x32xf32> to vector<1x32xf32>
    %29 = vector.broadcast %28 : vector<1x32xf32> to vector<16x32xf32>
    %30 = arith.subf %0, %29 : vector<16x32xf32>
    %31 = arith.mulf %30, %30 : vector<16x32xf32>
    %cst_8 = arith.constant dense<0.000000e+00> : vector<1x16xf32>
    %32 = tpu.matmul %2, %31, %cst_8 {dimension_numbers = #tpu.dot_dimension_numbers<[1], [1], [0], [0], [0, 0, 1, 0], [], []>} : vector<1x32xf32>, vector<16x32xf32>, vector<1x16xf32> -> vector<1x16xf32>
    %33 = vector.extract_strided_slice %1 {offsets = [6, 0], sizes = [1, 32], strides = [1, 1]} : vector<8x32xf32> to vector<1x32xf32>
    %34 = vector.broadcast %33 : vector<1x32xf32> to vector<16x32xf32>
    %35 = arith.subf %0, %34 : vector<16x32xf32>
    %36 = arith.mulf %35, %35 : vector<16x32xf32>
    %cst_9 = arith.constant dense<0.000000e+00> : vector<1x16xf32>
    %37 = tpu.matmul %2, %36, %cst_9 {dimension_numbers = #tpu.dot_dimension_numbers<[1], [1], [0], [0], [0, 0, 1, 0], [], []>} : vector<1x32xf32>, vector<16x32xf32>, vector<1x16xf32> -> vector<1x16xf32>
    %38 = vector.extract_strided_slice %1 {offsets = [7, 0], sizes = [1, 32], strides = [1, 1]} : vector<8x32xf32> to vector<1x32xf32>
    %39 = vector.broadcast %38 : vector<1x32xf32> to vector<16x32xf32>
    %40 = arith.subf %0, %39 : vector<16x32xf32>
    %41 = arith.mulf %40, %40 : vector<16x32xf32>
    %cst_10 = arith.constant dense<0.000000e+00> : vector<1x16xf32>
    %42 = tpu.matmul %2, %41, %cst_10 {dimension_numbers = #tpu.dot_dimension_numbers<[1], [1], [0], [0], [0, 0, 1, 0], [], []>} : vector<1x32xf32>, vector<16x32xf32>, vector<1x16xf32> -> vector<1x16xf32>
    %43 = tpu.concatenate %7, %12, %17, %22, %27, %32, %37, %42 in 0 : vector<1x16xf32>, vector<1x16xf32>, vector<1x16xf32>, vector<1x16xf32>, vector<1x16xf32>, vector<1x16xf32>, vector<1x16xf32>, vector<1x16xf32> -> vector<8x16xf32>
    %cst_11 = arith.constant 1.000000e+00 : f32
    %44 = vector.broadcast %cst_11 : f32 to vector<8x16xf32>
    %45 = arith.addf %44, %43 : vector<8x16xf32>
    %46 = tpu.reciprocal %45 {approx = true} : vector<8x16xf32> -> vector<8x16xf32>
    %47 = arith.mulf %45, %46 : vector<8x16xf32>
    %cst_12 = arith.constant 2.000000e+00 : f32
    %48 = vector.broadcast %cst_12 : f32 to vector<8x16xf32>
    %49 = arith.subf %48, %47 : vector<8x16xf32>
    %50 = arith.mulf %46, %49 : vector<8x16xf32>
    %c0_13 = arith.constant 0 : index
    %c0_14 = arith.constant 0 : index
    %51 = vector.load %arg3[%c0_13, %c0_14] : memref<8x16xf32, #tpu.memory_space<vmem>>, vector<8x16xf32>
    tpu.vector_store %arg3[%c0_13, %c0_14], %50 {strides = array<i32>} : memref<8x16xf32, #tpu.memory_space<vmem>>, vector<8x16xf32>,
    %c0_i32 = arith.constant 0 : i32
    %52 = arith.cmpi eq, %arg0, %c0_i32 : i32
    %53 = arith.extui %52 : i1 to i32
    %c0_i32_15 = arith.constant 0 : i32
    %54 = arith.cmpi ne, %53, %c0_i32_15 : i32
    scf.if %54 {
      %cst_21 = arith.constant 0.000000e+00 : f32
      %60 = vector.broadcast %cst_21 : f32 to vector<8x1xf32>
      %c0_22 = arith.constant 0 : index
      %c0_23 = arith.constant 0 : index
      %61 = vector.load %arg4[%c0_22, %c0_23] : memref<8x1xf32, #tpu.memory_space<vmem>>, vector<8x1xf32>
      tpu.vector_store %arg4[%c0_22, %c0_23], %60 {strides = array<i32>} : memref<8x1xf32, #tpu.memory_space<vmem>>, vector<8x1xf32>,
    } else {
    }
    %c0_16 = arith.constant 0 : index
    %c0_17 = arith.constant 0 : index
    %55 = vector.load %arg4[%c0_16, %c0_17] : memref<8x1xf32, #tpu.memory_space<vmem>>, vector<8x1xf32>
    %cst_18 = arith.constant dense<0.000000e+00> : vector<8xf32>
    %56 = vector.multi_reduction <add>, %50, %cst_18 [1] : vector<8x16xf32> to vector<8xf32>
    %57 = vector.shape_cast %56 : vector<8xf32> to vector<8x1xf32>
    %58 = arith.addf %55, %57 : vector<8x1xf32>
    %c0_19 = arith.constant 0 : index
    %c0_20 = arith.constant 0 : index
    %59 = vector.load %arg4[%c0_19, %c0_20] : memref<8x1xf32, #tpu.memory_space<vmem>>, vector<8x1xf32>
    tpu.vector_store %arg4[%c0_19, %c0_20], %58 {strides = array<i32>} : memref<8x1xf32, #tpu.memory_space<vmem>>, vector<8x1xf32>,
    return
  }
  func.func @transform_0(%arg0: i32) -> (i32, i32) {
    %c0_i32 = arith.constant 0 : i32
    %c0_i32_0 = arith.constant 0 : i32
    return %arg0, %c0_i32 : i32, i32
  }
  func.func @transform_1(%arg0: i32) -> (i32, i32) {
    %c0_i32 = arith.constant 0 : i32
    %c0_i32_0 = arith.constant 0 : i32
    %c0_i32_1 = arith.constant 0 : i32
    return %c0_i32, %c0_i32_0 : i32, i32
  }
  func.func @transform_2(%arg0: i32) -> (i32, i32) {
    %c0_i32 = arith.constant 0 : i32
    %c0_i32_0 = arith.constant 0 : i32
    return %c0_i32, %arg0 : i32, i32
  }
  func.func @transform_3(%arg0: i32) -> (i32, i32) {
    %c0_i32 = arith.constant 0 : i32
    %c0_i32_0 = arith.constant 0 : i32
    %c0_i32_1 = arith.constant 0 : i32
    return %c0_i32, %c0_i32_0 : i32, i32
  }
}

</mosaic_0001>

<llo_original>
// kernel: tpu_custom_call.1
$region0: #{tpu_custom_call.1}
  #allocation0 [shape = 'u32[]', space=smem, size = 0x4, offset = 0x4, fixed_abs, tag = 'smem constant byte address 0x4 - core index']
  #allocation1 [shape = 'u32[144,128]{1,0:T(1,128)}', space=vmem, size = 0x12000, scoped, tag = 'internal scratch']
  %s0 = inlined_call_operand.hbm [shape: f32[16,32], index: 0, kind: input, shape index: {}]
  %s1 = inlined_call_operand.hbm [shape: f32[8,32], index: 1, kind: input, shape index: {}]
  %s2 = inlined_call_operand.hbm [shape: f32[8,16], index: 2, kind: output, shape index: {0}]
  %s3 = inlined_call_operand.vmem [shape: f32[8,1], index: 3, kind: output, shape index: {1}]
  %4 = xla_tuple %s2, %s3
  %s5 = sld [smem:[#allocation0]]
  $region38: #{tpu_custom_call.1} parent=0
    _
  %s7 = ssub.s32 1, %s5
  %s8 = scalar_select 0, %s7, %s5
  $region1: #{tpu_custom_call.1} parent=0
    #allocation2 [shape = 'u8[8192]{0}', space=vmem, size = 0x2000, scoped, tag = 'input window, operand 0, single buffered']
    #allocation3 [shape = 's32[1]{0}', space=sflag, size = 0x4, scoped, tag = 'scoped memory for tpu_custom_call.1']
    #allocation4 [shape = 's32[1]{0}', space=sflag, size = 0x4, scoped, tag = 'scoped memory for tpu_custom_call.1']
    #allocation5 [shape = 'u8[4096]{0}', space=vmem, size = 0x1000, scoped, tag = 'input window, operand 1, single buffered']
    #allocation6 [shape = 's32[1]{0}', space=sflag, size = 0x4, scoped, tag = 'scoped memory for tpu_custom_call.1']
    #allocation7 [shape = 'u8[4096]{0}', space=vmem, size = 0x1000, scoped, tag = 'output window, operand 0, single buffered']
    %9 = vsyncpa [#allocation3], 0
    %10 = vsyncpa [#allocation6], 0
    %11 = vsyncpa [#allocation4], 0
    // Predicated region
    $region2: #{tpu_custom_call.1} parent=1 // pred_check
      _
    $region3: #{tpu_custom_call.1} parent=1 // pred_check_branch
      %13 = sbr.rel (0) target = $region5
    $region4: #{tpu_custom_call.1} parent=1 // pred_region
      %s15 = ssub.s32 256, 256
      %16 = vsyncadd [#allocation3], %s15
      %s17 = sshll.u32 [#allocation2], 4
      %s18 = int_to_ptr.vmem [resolvable:$true] %s17
      %23 = dma.hbm_to_vmem [thread:$0]  %s0, 256, %s18, [#allocation3], 128, 128, 8
    $region5: #{tpu_custom_call.1} parent=1 // pred_fallthru
      _
    // Predicated region
    $region6: #{tpu_custom_call.1} parent=1 // pred_check
      _
    $region7: #{tpu_custom_call.1} parent=1 // pred_check_branch
      %25 = sbr.rel (0) target = $region9
    $region8: #{tpu_custom_call.1} parent=1 // pred_region
      %s27 = ssub.s32 128, 128
      %28 = vsyncadd [#allocation6], %s27
      %s30 = sshll.u32 [#allocation5], 4
      %s31 = int_to_ptr.vmem [resolvable:$true] %s30
      %33 = dma.hbm_to_vmem [thread:$0]  %s1, 128, %s31, [#allocation6]
    $region9: #{tpu_custom_call.1} parent=1 // pred_fallthru
      _
    // Predicated region
    $region10: #{tpu_custom_call.1} parent=1 // pred_check
      _
    $region11: #{tpu_custom_call.1} parent=1 // pred_check_branch
      %35 = sbr.rel (0) target = $region13
    $region12: #{tpu_custom_call.1} parent=1 // pred_region
      %36 = dma.done [#allocation3], 256
    $region13: #{tpu_custom_call.1} parent=1 // pred_fallthru
      _
    // Predicated region
    $region14: #{tpu_custom_call.1} parent=1 // pred_check
      _
    $region15: #{tpu_custom_call.1} parent=1 // pred_check_branch
      %38 = sbr.rel (0) target = $region17
    $region16: #{tpu_custom_call.1} parent=1 // pred_region
      %39 = dma.done [#allocation6], 128
    $region17: #{tpu_custom_call.1} parent=1 // pred_fallthru
      _
    %v40 = vld [vmem:[#allocation2] sm:$0xff]
    %v41 = vld [vmem:[#allocation2 + $0x8] sm:$0xff]
    %v42 = vld [vmem:[#allocation5] sm:$0xff]
    %v43 = vlaneseq
    %v44 = vshrl.u32 %v43, 7
    %v45 = vsub.s32 0, %v44
    %v46 = vrot.slane %v42, %v45
    %v47 = vsub.f32 %v40, %v46
    %v48 = vsub.f32 %v41, %v46
    %v49 = vmul.f32 %v47, %v47
    %v50 = vmul.f32 %v48, %v48
    %vm51 = vcmask 261120
    %v53 = vsel %vm51, 1.0, 0
    %v56 = vsel %vm51, %v49, 0
    %v59 = vsel %vm51, %v50, 0
    %61 = vmatprep.subr.mxu0 0.0
    %62 = vmatpush1.xpose.msra.mxu0 %v56
    %63 = vmatprep.subr.mxu0 0.0
    %64 = vmatpush1.xpose.msra.mxu0 %v59
    %65 = vmatprep.subr.mxu0 0.0
    %66 = vmatpush1.xpose.msra.mxu0 0.0
    %67 = vmatprep.subr.mxu0 0.0
    %68 = vmatpush1.xpose.msra.mxu0 0.0
    %69 = vmatprep.subr.mxu0 0.0
    %70 = vmatpush1.xpose.msra.mxu0 0.0
    %71 = vmatprep.subr.mxu0 0.0
    %72 = vmatpush1.xpose.msra.mxu0 0.0
    %73 = vmatprep.subr.mxu0 0.0
    %74 = vmatpush1.xpose.msra.mxu0 0.0
    %75 = vmatprep.subr.mxu0 0.0
    %76 = vmatpush1.xpose.msra.mxu0 0.0
    %77 = vmatprep.subr.mxu0 0.0
    %78 = vmatpush1.xpose.msra.mxu0 0.0
    %79 = vmatprep.subr.mxu0 0.0
    %80 = vmatpush1.xpose.msra.mxu0 0.0
    %81 = vmatprep.subr.mxu0 0.0
    %82 = vmatpush1.xpose.msra.mxu0 0.0
    %83 = vmatprep.subr.mxu0 0.0
    %84 = vmatpush1.xpose.msra.mxu0 0.0
    %85 = vmatprep.subr.mxu0 0.0
    %86 = vmatpush1.xpose.msra.mxu0 0.0
    %87 = vmatprep.subr.mxu0 0.0
    %88 = vmatpush1.xpose.msra.mxu0 0.0
    %89 = vmatprep.subr.mxu0 0.0
    %90 = vmatpush1.xpose.msra.mxu0 0.0
    %91 = vmatprep.subr.mxu0 0.0
    %92 = vmatpush1.xpose.msra.mxu0 0.0
    %93 = vmatprep.subr.mxu0 0.0
    %94 = vmatpush1.xpose.msra.mxu0 0.0
    %95 = vmatprep.subr.mxu0 0.0
    %96 = vmatpush1.xpose.msra.mxu0 0.0
    %97 = vmatprep.subr.mxu0 0.0
    %98 = vmatpush1.xpose.msra.mxu0 0.0
    %99 = vmatprep.subr.mxu0 0.0
    %100 = vmatpush1.xpose.msra.mxu0 0.0
    %101 = vmatprep.subr.mxu0 0.0
    %102 = vmatpush1.xpose.msra.mxu0 0.0
    %103 = vmatprep.subr.mxu0 0.0
    %104 = vmatpush1.xpose.msra.mxu0 0.0
    %105 = vmatprep.subr.mxu0 0.0
    %106 = vmatpush1.xpose.msra.mxu0 0.0
    %107 = vmatprep.subr.mxu0 0.0
    %108 = vmatpush1.xpose.msra.mxu0 0.0
    %109 = vmatprep.subr.mxu0 0.0
    %110 = vmatpush1.xpose.msra.mxu0 0.0
    %111 = vmatprep.subr.mxu0 0.0
    %112 = vmatpush1.xpose.msra.mxu0 0.0
    %113 = vmatprep.subr.mxu0 0.0
    %114 = vmatpush1.xpose.msra.mxu0 0.0
    %115 = vmatprep.subr.mxu0 0.0
    %116 = vmatpush1.xpose.msra.mxu0 0.0
    %117 = vmatprep.subr.mxu0 0.0
    %118 = vmatpush1.xpose.msra.mxu0 0.0
    %119 = vmatprep.subr.mxu0 0.0
    %120 = vmatpush1.xpose.msra.mxu0 0.0
    %121 = vmatprep.subr.mxu0 0.0
    %122 = vmatpush1.xpose.msra.mxu0 0.0
    %123 = vmatprep.subr.mxu0 0.0
    %124 = vmatpush1.xpose.msra.mxu0 0.0
    %125 = vmatprep.mubr.f32.mxu0 0.0
    %126 = vmatmul.mubr.f32.gmra.mrb[0].mxu0 %v53
    %v127 = vpop.f32.mrb[0].mxu0
    %v128 = vadd.f32 0.0, %v127
    %v129 = vpop.f32.mrb[0].mxu0
    %130 = vdwg.mxu0
    %v131 = vlaneseq
    %v132 = vshrl.u32 %v131, 7
    %v133 = vsub.s32 1, %v132
    %v134 = vrot.slane %v42, %v133
    %v135 = vsub.f32 %v40, %v134
    %v136 = vsub.f32 %v41, %v134
    %v137 = vmul.f32 %v135, %v135
    %v138 = vmul.f32 %v136, %v136
    %v140 = vsel %vm51, %v137, 0
    %v143 = vsel %vm51, %v138, 0
    %145 = vmatprep.subr.mxu0 0.0
    %146 = vmatpush1.xpose.msra.mxu0 %v140
    %147 = vmatprep.subr.mxu0 0.0
    %148 = vmatpush1.xpose.msra.mxu0 %v143
    %149 = vmatprep.subr.mxu0 0.0
    %150 = vmatpush1.xpose.msra.mxu0 0.0
    %151 = vmatprep.subr.mxu0 0.0
    %152 = vmatpush1.xpose.msra.mxu0 0.0
    %153 = vmatprep.subr.mxu0 0.0
    %154 = vmatpush1.xpose.msra.mxu0 0.0
    %155 = vmatprep.subr.mxu0 0.0
    %156 = vmatpush1.xpose.msra.mxu0 0.0
    %157 = vmatprep.subr.mxu0 0.0
    %158 = vmatpush1.xpose.msra.mxu0 0.0
    %159 = vmatprep.subr.mxu0 0.0
    %160 = vmatpush1.xpose.msra.mxu0 0.0
    %161 = vmatprep.subr.mxu0 0.0
    %162 = vmatpush1.xpose.msra.mxu0 0.0
    %163 = vmatprep.subr.mxu0 0.0
    %164 = vmatpush1.xpose.msra.mxu0 0.0
    %165 = vmatprep.subr.mxu0 0.0
    %166 = vmatpush1.xpose.msra.mxu0 0.0
    %167 = vmatprep.subr.mxu0 0.0
    %168 = vmatpush1.xpose.msra.mxu0 0.0
    %169 = vmatprep.subr.mxu0 0.0
    %170 = vmatpush1.xpose.msra.mxu0 0.0
    %171 = vmatprep.subr.mxu0 0.0
    %172 = vmatpush1.xpose.msra.mxu0 0.0
    %173 = vmatprep.subr.mxu0 0.0
    %174 = vmatpush1.xpose.msra.mxu0 0.0
    %175 = vmatprep.subr.mxu0 0.0
    %176 = vmatpush1.xpose.msra.mxu0 0.0
    %177 = vmatprep.subr.mxu0 0.0
    %178 = vmatpush1.xpose.msra.mxu0 0.0
    %179 = vmatprep.subr.mxu0 0.0
    %180 = vmatpush1.xpose.msra.mxu0 0.0
    %181 = vmatprep.subr.mxu0 0.0
    %182 = vmatpush1.xpose.msra.mxu0 0.0
    %183 = vmatprep.subr.mxu0 0.0
    %184 = vmatpush1.xpose.msra.mxu0 0.0
    %185 = vmatprep.subr.mxu0 0.0
    %186 = vmatpush1.xpose.msra.mxu0 0.0
    %187 = vmatprep.subr.mxu0 0.0
    %188 = vmatpush1.xpose.msra.mxu0 0.0
    %189 = vmatprep.subr.mxu0 0.0
    %190 = vmatpush1.xpose.msra.mxu0 0.0
    %191 = vmatprep.subr.mxu0 0.0
    %192 = vmatpush1.xpose.msra.mxu0 0.0
    %193 = vmatprep.subr.mxu0 0.0
    %194 = vmatpush1.xpose.msra.mxu0 0.0
    %195 = vmatprep.subr.mxu0 0.0
    %196 = vmatpush1.xpose.msra.mxu0 0.0
    %197 = vmatprep.subr.mxu0 0.0
    %198 = vmatpush1.xpose.msra.mxu0 0.0
    %199 = vmatprep.subr.mxu0 0.0
    %200 = vmatpush1.xpose.msra.mxu0 0.0
    %201 = vmatprep.subr.mxu0 0.0
    %202 = vmatpush1.xpose.msra.mxu0 0.0
    %203 = vmatprep.subr.mxu0 0.0
    %204 = vmatpush1.xpose.msra.mxu0 0.0
    %205 = vmatprep.subr.mxu0 0.0
    %206 = vmatpush1.xpose.msra.mxu0 0.0
    %207 = vmatprep.subr.mxu0 0.0
    %208 = vmatpush1.xpose.msra.mxu0 0.0
    %209 = vmatprep.mubr.f32.mxu0 0.0
    %210 = vmatmul.mubr.f32.gmra.mrb[0].mxu0 %v53
    %v211 = vpop.f32.mrb[0].mxu0
    %v212 = vadd.f32 0.0, %v211
    %v213 = vpop.f32.mrb[0].mxu0
    %214 = vdwg.mxu0
    %v215 = vlaneseq
    %v216 = vshrl.u32 %v215, 7
    %v217 = vsub.s32 2, %v216
    %v218 = vrot.slane %v42, %v217
    %v219 = vsub.f32 %v40, %v218
    %v220 = vsub.f32 %v41, %v218
    %v221 = vmul.f32 %v219, %v219
    %v222 = vmul.f32 %v220, %v220
    %v224 = vsel %vm51, %v221, 0
    %v227 = vsel %vm51, %v222, 0
    %229 = vmatprep.subr.mxu0 0.0
    %230 = vmatpush1.xpose.msra.mxu0 %v224
    %231 = vmatprep.subr.mxu0 0.0
    %232 = vmatpush1.xpose.msra.mxu0 %v227
    %233 = vmatprep.subr.mxu0 0.0
    %234 = vmatpush1.xpose.msra.mxu0 0.0
    %235 = vmatprep.subr.mxu0 0.0
    %236 = vmatpush1.xpose.msra.mxu0 0.0
    %237 = vmatprep.subr.mxu0 0.0
    %238 = vmatpush1.xpose.msra.mxu0 0.0
    %239 = vmatprep.subr.mxu0 0.0
    %240 = vmatpush1.xpose.msra.mxu0 0.0
    %241 = vmatprep.subr.mxu0 0.0
    %242 = vmatpush1.xpose.msra.mxu0 0.0
    %243 = vmatprep.subr.mxu0 0.0
    %244 = vmatpush1.xpose.msra.mxu0 0.0
    %245 = vmatprep.subr.mxu0 0.0
    %246 = vmatpush1.xpose.msra.mxu0 0.0
    %247 = vmatprep.subr.mxu0 0.0
    %248 = vmatpush1.xpose.msra.mxu0 0.0
    %249 = vmatprep.subr.mxu0 0.0
    %250 = vmatpush1.xpose.msra.mxu0 0.0
    %251 = vmatprep.subr.mxu0 0.0
    %252 = vmatpush1.xpose.msra.mxu0 0.0
    %253 = vmatprep.subr.mxu0 0.0
    %254 = vmatpush1.xpose.msra.mxu0 0.0
    %255 = vmatprep.subr.mxu0 0.0
    %256 = vmatpush1.xpose.msra.mxu0 0.0
    %257 = vmatprep.subr.mxu0 0.0
    %258 = vmatpush1.xpose.msra.mxu0 0.0
    %259 = vmatprep.subr.mxu0 0.0
    %260 = vmatpush1.xpose.msra.mxu0 0.0
    %261 = vmatprep.subr.mxu0 0.0
    %262 = vmatpush1.xpose.msra.mxu0 0.0
    %263 = vmatprep.subr.mxu0 0.0
    %264 = vmatpush1.xpose.msra.mxu0 0.0
    %265 = vmatprep.subr.mxu0 0.0
    %266 = vmatpush1.xpose.msra.mxu0 0.0
    %267 = vmatprep.subr.mxu0 0.0
    %268 = vmatpush1.xpose.msra.mxu0 0.0
    %269 = vmatprep.subr.mxu0 0.0
    %270 = vmatpush1.xpose.msra.mxu0 0.0
    %271 = vmatprep.subr.mxu0 0.0
    %272 = vmatpush1.xpose.msra.mxu0 0.0
    %273 = vmatprep.subr.mxu0 0.0
    %274 = vmatpush1.xpose.msra.mxu0 0.0
    %275 = vmatprep.subr.mxu0 0.0
    %276 = vmatpush1.xpose.msra.mxu0 0.0
    %277 = vmatprep.subr.mxu0 0.0
    %278 = vmatpush1.xpose.msra.mxu0 0.0
    %279 = vmatprep.subr.mxu0 0.0
    %280 = vmatpush1.xpose.msra.mxu0 0.0
    %281 = vmatprep.subr.mxu0 0.0
    %282 = vmatpush1.xpose.msra.mxu0 0.0
    %283 = vmatprep.subr.mxu0 0.0
    %284 = vmatpush1.xpose.msra.mxu0 0.0
    %285 = vmatprep.subr.mxu0 0.0
    %286 = vmatpush1.xpose.msra.mxu0 0.0
    %287 = vmatprep.subr.mxu0 0.0
    %288 = vmatpush1.xpose.msra.mxu0 0.0
    %289 = vmatprep.subr.mxu0 0.0
    %290 = vmatpush1.xpose.msra.mxu0 0.0
    %291 = vmatprep.subr.mxu0 0.0
    %292 = vmatpush1.xpose.msra.mxu0 0.0
    %293 = vmatprep.mubr.f32.mxu0 0.0
    %294 = vmatmul.mubr.f32.gmra.mrb[0].mxu0 %v53
    %v295 = vpop.f32.mrb[0].mxu0
    %v296 = vadd.f32 0.0, %v295
    %v297 = vpop.f32.mrb[0].mxu0
    %298 = vdwg.mxu0
    %v299 = vlaneseq
    %v300 = vshrl.u32 %v299, 7
    %v301 = vsub.s32 3, %v300
    %v302 = vrot.slane %v42, %v301
    %v303 = vsub.f32 %v40, %v302
    %v304 = vsub.f32 %v41, %v302
    %v305 = vmul.f32 %v303, %v303
    %v306 = vmul.f32 %v304, %v304
    %v308 = vsel %vm51, %v305, 0
    %v311 = vsel %vm51, %v306, 0
    %313 = vmatprep.subr.mxu0 0.0
    %314 = vmatpush1.xpose.msra.mxu0 %v308
    %315 = vmatprep.subr.mxu0 0.0
    %316 = vmatpush1.xpose.msra.mxu0 %v311
    %317 = vmatprep.subr.mxu0 0.0
    %318 = vmatpush1.xpose.msra.mxu0 0.0
    %319 = vmatprep.subr.mxu0 0.0
    %320 = vmatpush1.xpose.msra.mxu0 0.0
    %321 = vmatprep.subr.mxu0 0.0
    %322 = vmatpush1.xpose.msra.mxu0 0.0
    %323 = vmatprep.subr.mxu0 0.0
    %324 = vmatpush1.xpose.msra.mxu0 0.0
    %325 = vmatprep.subr.mxu0 0.0
    %326 = vmatpush1.xpose.msra.mxu0 0.0
    %327 = vmatprep.subr.mxu0 0.0
    %328 = vmatpush1.xpose.msra.mxu0 0.0
    %329 = vmatprep.subr.mxu0 0.0
    %330 = vmatpush1.xpose.msra.mxu0 0.0
    %331 = vmatprep.subr.mxu0 0.0
    %332 = vmatpush1.xpose.msra.mxu0 0.0
    %333 = vmatprep.subr.mxu0 0.0
    %334 = vmatpush1.xpose.msra.mxu0 0.0
    %335 = vmatprep.subr.mxu0 0.0
    %336 = vmatpush1.xpose.msra.mxu0 0.0
    %337 = vmatprep.subr.mxu0 0.0
    %338 = vmatpush1.xpose.msra.mxu0 0.0
    %339 = vmatprep.subr.mxu0 0.0
    %340 = vmatpush1.xpose.msra.mxu0 0.0
    %341 = vmatprep.subr.mxu0 0.0
    %342 = vmatpush1.xpose.msra.mxu0 0.0
    %343 = vmatprep.subr.mxu0 0.0
    %344 = vmatpush1.xpose.msra.mxu0 0.0
    %345 = vmatprep.subr.mxu0 0.0
    %346 = vmatpush1.xpose.msra.mxu0 0.0
    %347 = vmatprep.subr.mxu0 0.0
    %348 = vmatpush1.xpose.msra.mxu0 0.0
    %349 = vmatprep.subr.mxu0 0.0
    %350 = vmatpush1.xpose.msra.mxu0 0.0
    %351 = vmatprep.subr.mxu0 0.0
    %352 = vmatpush1.xpose.msra.mxu0 0.0
    %353 = vmatprep.subr.mxu0 0.0
    %354 = vmatpush1.xpose.msra.mxu0 0.0
    %355 = vmatprep.subr.mxu0 0.0
    %356 = vmatpush1.xpose.msra.mxu0 0.0
    %357 = vmatprep.subr.mxu0 0.0
    %358 = vmatpush1.xpose.msra.mxu0 0.0
    %359 = vmatprep.subr.mxu0 0.0
    %360 = vmatpush1.xpose.msra.mxu0 0.0
    %361 = vmatprep.subr.mxu0 0.0
    %362 = vmatpush1.xpose.msra.mxu0 0.0
    %363 = vmatprep.subr.mxu0 0.0
    %364 = vmatpush1.xpose.msra.mxu0 0.0
    %365 = vmatprep.subr.mxu0 0.0
    %366 = vmatpush1.xpose.msra.mxu0 0.0
    %367 = vmatprep.subr.mxu0 0.0
    %368 = vmatpush1.xpose.msra.mxu0 0.0
    %369 = vmatprep.subr.mxu0 0.0
    %370 = vmatpush1.xpose.msra.mxu0 0.0
    %371 = vmatprep.subr.mxu0 0.0
    %372 = vmatpush1.xpose.msra.mxu0 0.0
    %373 = vmatprep.subr.mxu0 0.0
    %374 = vmatpush1.xpose.msra.mxu0 0.0
    %375 = vmatprep.subr.mxu0 0.0
    %376 = vmatpush1.xpose.msra.mxu0 0.0
    %377 = vmatprep.mubr.f32.mxu0 0.0
    %378 = vmatmul.mubr.f32.gmra.mrb[0].mxu0 %v53
    %v379 = vpop.f32.mrb[0].mxu0
    %v380 = vadd.f32 0.0, %v379
    %v381 = vpop.f32.mrb[0].mxu0
    %382 = vdwg.mxu0
    %v383 = vlaneseq
    %v384 = vshrl.u32 %v383, 7
    %v385 = vsub.s32 4, %v384
    %v386 = vrot.slane %v42, %v385
    %v387 = vsub.f32 %v40, %v386
    %v388 = vsub.f32 %v41, %v386
    %v389 = vmul.f32 %v387, %v387
    %v390 = vmul.f32 %v388, %v388
    %v392 = vsel %vm51, %v389, 0
    %v395 = vsel %vm51, %v390, 0
    %397 = vmatprep.subr.mxu0 0.0
    %398 = vmatpush1.xpose.msra.mxu0 %v392
    %399 = vmatprep.subr.mxu0 0.0
    %400 = vmatpush1.xpose.msra.mxu0 %v395
    %401 = vmatprep.subr.mxu0 0.0
    %402 = vmatpush1.xpose.msra.mxu0 0.0
    %403 = vmatprep.subr.mxu0 0.0
    %404 = vmatpush1.xpose.msra.mxu0 0.0
    %405 = vmatprep.subr.mxu0 0.0
    %406 = vmatpush1.xpose.msra.mxu0 0.0
    %407 = vmatprep.subr.mxu0 0.0
    %408 = vmatpush1.xpose.msra.mxu0 0.0
    %409 = vmatprep.subr.mxu0 0.0
    %410 = vmatpush1.xpose.msra.mxu0 0.0
    %411 = vmatprep.subr.mxu0 0.0
    %412 = vmatpush1.xpose.msra.mxu0 0.0
    %413 = vmatprep.subr.mxu0 0.0
    %414 = vmatpush1.xpose.msra.mxu0 0.0
    %415 = vmatprep.subr.mxu0 0.0
    %416 = vmatpush1.xpose.msra.mxu0 0.0
    %417 = vmatprep.subr.mxu0 0.0
    %418 = vmatpush1.xpose.msra.mxu0 0.0
    %419 = vmatprep.subr.mxu0 0.0
    %420 = vmatpush1.xpose.msra.mxu0 0.0
    %421 = vmatprep.subr.mxu0 0.0
    %422 = vmatpush1.xpose.msra.mxu0 0.0
    %423 = vmatprep.subr.mxu0 0.0
    %424 = vmatpush1.xpose.msra.mxu0 0.0
    %425 = vmatprep.subr.mxu0 0.0
    %426 = vmatpush1.xpose.msra.mxu0 0.0
    %427 = vmatprep.subr.mxu0 0.0
    %428 = vmatpush1.xpose.msra.mxu0 0.0
    %429 = vmatprep.subr.mxu0 0.0
    %430 = vmatpush1.xpose.msra.mxu0 0.0
    %431 = vmatprep.subr.mxu0 0.0
    %432 = vmatpush1.xpose.msra.mxu0 0.0
    %433 = vmatprep.subr.mxu0 0.0
    %434 = vmatpush1.xpose.msra.mxu0 0.0
    %435 = vmatprep.subr.mxu0 0.0
    %436 = vmatpush1.xpose.msra.mxu0 0.0
    %437 = vmatprep.subr.mxu0 0.0
    %438 = vmatpush1.xpose.msra.mxu0 0.0
    %439 = vmatprep.subr.mxu0 0.0
    %440 = vmatpush1.xpose.msra.mxu0 0.0
    %441 = vmatprep.subr.mxu0 0.0
    %442 = vmatpush1.xpose.msra.mxu0 0.0
    %443 = vmatprep.subr.mxu0 0.0
    %444 = vmatpush1.xpose.msra.mxu0 0.0
    %445 = vmatprep.subr.mxu0 0.0
    %446 = vmatpush1.xpose.msra.mxu0 0.0
    %447 = vmatprep.subr.mxu0 0.0
    %448 = vmatpush1.xpose.msra.mxu0 0.0
    %449 = vmatprep.subr.mxu0 0.0
    %450 = vmatpush1.xpose.msra.mxu0 0.0
    %451 = vmatprep.subr.mxu0 0.0
    %452 = vmatpush1.xpose.msra.mxu0 0.0
    %453 = vmatprep.subr.mxu0 0.0
    %454 = vmatpush1.xpose.msra.mxu0 0.0
    %455 = vmatprep.subr.mxu0 0.0
    %456 = vmatpush1.xpose.msra.mxu0 0.0
    %457 = vmatprep.subr.mxu0 0.0
    %458 = vmatpush1.xpose.msra.mxu0 0.0
    %459 = vmatprep.subr.mxu0 0.0
    %460 = vmatpush1.xpose.msra.mxu0 0.0
    %461 = vmatprep.mubr.f32.mxu0 0.0
    %462 = vmatmul.mubr.f32.gmra.mrb[0].mxu0 %v53
    %v463 = vpop.f32.mrb[0].mxu0
    %v464 = vadd.f32 0.0, %v463
    %v465 = vpop.f32.mrb[0].mxu0
    %466 = vdwg.mxu0
    %v467 = vlaneseq
    %v468 = vshrl.u32 %v467, 7
    %v469 = vsub.s32 5, %v468
    %v470 = vrot.slane %v42, %v469
    %v471 = vsub.f32 %v40, %v470
    %v472 = vsub.f32 %v41, %v470
    %v473 = vmul.f32 %v471, %v471
    %v474 = vmul.f32 %v472, %v472
    %v476 = vsel %vm51, %v473, 0
    %v479 = vsel %vm51, %v474, 0
    %481 = vmatprep.subr.mxu0 0.0
    %482 = vmatpush1.xpose.msra.mxu0 %v476
    %483 = vmatprep.subr.mxu0 0.0
    %484 = vmatpush1.xpose.msra.mxu0 %v479
    %485 = vmatprep.subr.mxu0 0.0
    %486 = vmatpush1.xpose.msra.mxu0 0.0
    %487 = vmatprep.subr.mxu0 0.0
    %488 = vmatpush1.xpose.msra.mxu0 0.0
    %489 = vmatprep.subr.mxu0 0.0
    %490 = vmatpush1.xpose.msra.mxu0 0.0
    %491 = vmatprep.subr.mxu0 0.0
    %492 = vmatpush1.xpose.msra.mxu0 0.0
    %493 = vmatprep.subr.mxu0 0.0
    %494 = vmatpush1.xpose.msra.mxu0 0.0
    %495 = vmatprep.subr.mxu0 0.0
    %496 = vmatpush1.xpose.msra.mxu0 0.0
    %497 = vmatprep.subr.mxu0 0.0
    %498 = vmatpush1.xpose.msra.mxu0 0.0
    %499 = vmatprep.subr.mxu0 0.0
    %500 = vmatpush1.xpose.msra.mxu0 0.0
    %501 = vmatprep.subr.mxu0 0.0
    %502 = vmatpush1.xpose.msra.mxu0 0.0
    %503 = vmatprep.subr.mxu0 0.0
    %504 = vmatpush1.xpose.msra.mxu0 0.0
    %505 = vmatprep.subr.mxu0 0.0
    %506 = vmatpush1.xpose.msra.mxu0 0.0
    %507 = vmatprep.subr.mxu0 0.0
    %508 = vmatpush1.xpose.msra.mxu0 0.0
    %509 = vmatprep.subr.mxu0 0.0
    %510 = vmatpush1.xpose.msra.mxu0 0.0
    %511 = vmatprep.subr.mxu0 0.0
    %512 = vmatpush1.xpose.msra.mxu0 0.0
    %513 = vmatprep.subr.mxu0 0.0
    %514 = vmatpush1.xpose.msra.mxu0 0.0
    %515 = vmatprep.subr.mxu0 0.0
    %516 = vmatpush1.xpose.msra.mxu0 0.0
    %517 = vmatprep.subr.mxu0 0.0
    %518 = vmatpush1.xpose.msra.mxu0 0.0
    %519 = vmatprep.subr.mxu0 0.0
    %520 = vmatpush1.xpose.msra.mxu0 0.0
    %521 = vmatprep.subr.mxu0 0.0
    %522 = vmatpush1.xpose.msra.mxu0 0.0
    %523 = vmatprep.subr.mxu0 0.0
    %524 = vmatpush1.xpose.msra.mxu0 0.0
    %525 = vmatprep.subr.mxu0 0.0
    %526 = vmatpush1.xpose.msra.mxu0 0.0
    %527 = vmatprep.subr.mxu0 0.0
    %528 = vmatpush1.xpose.msra.mxu0 0.0
    %529 = vmatprep.subr.mxu0 0.0
    %530 = vmatpush1.xpose.msra.mxu0 0.0
    %531 = vmatprep.subr.mxu0 0.0
    %532 = vmatpush1.xpose.msra.mxu0 0.0
    %533 = vmatprep.subr.mxu0 0.0
    %534 = vmatpush1.xpose.msra.mxu0 0.0
    %535 = vmatprep.subr.mxu0 0.0
    %536 = vmatpush1.xpose.msra.mxu0 0.0
    %537 = vmatprep.subr.mxu0 0.0
    %538 = vmatpush1.xpose.msra.mxu0 0.0
    %539 = vmatprep.subr.mxu0 0.0
    %540 = vmatpush1.xpose.msra.mxu0 0.0
    %541 = vmatprep.subr.mxu0 0.0
    %542 = vmatpush1.xpose.msra.mxu0 0.0
    %543 = vmatprep.subr.mxu0 0.0
    %544 = vmatpush1.xpose.msra.mxu0 0.0
    %545 = vmatprep.mubr.f32.mxu0 0.0
    %546 = vmatmul.mubr.f32.gmra.mrb[0].mxu0 %v53
    %v547 = vpop.f32.mrb[0].mxu0
    %v548 = vadd.f32 0.0, %v547
    %v549 = vpop.f32.mrb[0].mxu0
    %550 = vdwg.mxu0
    %v551 = vlaneseq
    %v552 = vshrl.u32 %v551, 7
    %v553 = vsub.s32 6, %v552
    %v554 = vrot.slane %v42, %v553
    %v555 = vsub.f32 %v40, %v554
    %v556 = vsub.f32 %v41, %v554
    %v557 = vmul.f32 %v555, %v555
    %v558 = vmul.f32 %v556, %v556
    %v560 = vsel %vm51, %v557, 0
    %v563 = vsel %vm51, %v558, 0
    %565 = vmatprep.subr.mxu0 0.0
    %566 = vmatpush1.xpose.msra.mxu0 %v560
    %567 = vmatprep.subr.mxu0 0.0
    %568 = vmatpush1.xpose.msra.mxu0 %v563
    %569 = vmatprep.subr.mxu0 0.0
    %570 = vmatpush1.xpose.msra.mxu0 0.0
    %571 = vmatprep.subr.mxu0 0.0
    %572 = vmatpush1.xpose.msra.mxu0 0.0
    %573 = vmatprep.subr.mxu0 0.0
    %574 = vmatpush1.xpose.msra.mxu0 0.0
    %575 = vmatprep.subr.mxu0 0.0
    %576 = vmatpush1.xpose.msra.mxu0 0.0
    %577 = vmatprep.subr.mxu0 0.0
    %578 = vmatpush1.xpose.msra.mxu0 0.0
    %579 = vmatprep.subr.mxu0 0.0
    %580 = vmatpush1.xpose.msra.mxu0 0.0
    %581 = vmatprep.subr.mxu0 0.0
    %582 = vmatpush1.xpose.msra.mxu0 0.0
    %583 = vmatprep.subr.mxu0 0.0
    %584 = vmatpush1.xpose.msra.mxu0 0.0
    %585 = vmatprep.subr.mxu0 0.0
    %586 = vmatpush1.xpose.msra.mxu0 0.0
    %587 = vmatprep.subr.mxu0 0.0
    %588 = vmatpush1.xpose.msra.mxu0 0.0
    %589 = vmatprep.subr.mxu0 0.0
    %590 = vmatpush1.xpose.msra.mxu0 0.0
    %591 = vmatprep.subr.mxu0 0.0
    %592 = vmatpush1.xpose.msra.mxu0 0.0
    %593 = vmatprep.subr.mxu0 0.0
    %594 = vmatpush1.xpose.msra.mxu0 0.0
    %595 = vmatprep.subr.mxu0 0.0
    %596 = vmatpush1.xpose.msra.mxu0 0.0
    %597 = vmatprep.subr.mxu0 0.0
    %598 = vmatpush1.xpose.msra.mxu0 0.0
    %599 = vmatprep.subr.mxu0 0.0
    %600 = vmatpush1.xpose.msra.mxu0 0.0
    %601 = vmatprep.subr.mxu0 0.0
    %602 = vmatpush1.xpose.msra.mxu0 0.0
    %603 = vmatprep.subr.mxu0 0.0
    %604 = vmatpush1.xpose.msra.mxu0 0.0
    %605 = vmatprep.subr.mxu0 0.0
    %606 = vmatpush1.xpose.msra.mxu0 0.0
    %607 = vmatprep.subr.mxu0 0.0
    %608 = vmatpush1.xpose.msra.mxu0 0.0
    %609 = vmatprep.subr.mxu0 0.0
    %610 = vmatpush1.xpose.msra.mxu0 0.0
    %611 = vmatprep.subr.mxu0 0.0
    %612 = vmatpush1.xpose.msra.mxu0 0.0
    %613 = vmatprep.subr.mxu0 0.0
    %614 = vmatpush1.xpose.msra.mxu0 0.0
    %615 = vmatprep.subr.mxu0 0.0
    %616 = vmatpush1.xpose.msra.mxu0 0.0
    %617 = vmatprep.subr.mxu0 0.0
    %618 = vmatpush1.xpose.msra.mxu0 0.0
    %619 = vmatprep.subr.mxu0 0.0
    %620 = vmatpush1.xpose.msra.mxu0 0.0
    %621 = vmatprep.subr.mxu0 0.0
    %622 = vmatpush1.xpose.msra.mxu0 0.0
    %623 = vmatprep.subr.mxu0 0.0
    %624 = vmatpush1.xpose.msra.mxu0 0.0
    %625 = vmatprep.subr.mxu0 0.0
    %626 = vmatpush1.xpose.msra.mxu0 0.0
    %627 = vmatprep.subr.mxu0 0.0
    %628 = vmatpush1.xpose.msra.mxu0 0.0
    %629 = vmatprep.mubr.f32.mxu0 0.0
    %630 = vmatmul.mubr.f32.gmra.mrb[0].mxu0 %v53
    %v631 = vpop.f32.mrb[0].mxu0
    %v632 = vadd.f32 0.0, %v631
    %v633 = vpop.f32.mrb[0].mxu0
    %634 = vdwg.mxu0
    %v635 = vlaneseq
    %v636 = vshrl.u32 %v635, 7
    %v637 = vsub.s32 7, %v636
    %v638 = vrot.slane %v42, %v637
    %v639 = vsub.f32 %v40, %v638
    %v640 = vsub.f32 %v41, %v638
    %v641 = vmul.f32 %v639, %v639
    %v642 = vmul.f32 %v640, %v640
    %v644 = vsel %vm51, %v641, 0
    %v647 = vsel %vm51, %v642, 0
    %649 = vmatprep.subr.mxu0 0.0
    %650 = vmatpush1.xpose.msra.mxu0 %v644
    %651 = vmatprep.subr.mxu0 0.0
    %652 = vmatpush1.xpose.msra.mxu0 %v647
    %653 = vmatprep.subr.mxu0 0.0
    %654 = vmatpush1.xpose.msra.mxu0 0.0
    %655 = vmatprep.subr.mxu0 0.0
    %656 = vmatpush1.xpose.msra.mxu0 0.0
    %657 = vmatprep.subr.mxu0 0.0
    %658 = vmatpush1.xpose.msra.mxu0 0.0
    %659 = vmatprep.subr.mxu0 0.0
    %660 = vmatpush1.xpose.msra.mxu0 0.0
    %661 = vmatprep.subr.mxu0 0.0
    %662 = vmatpush1.xpose.msra.mxu0 0.0
    %663 = vmatprep.subr.mxu0 0.0
    %664 = vmatpush1.xpose.msra.mxu0 0.0
    %665 = vmatprep.subr.mxu0 0.0
    %666 = vmatpush1.xpose.msra.mxu0 0.0
    %667 = vmatprep.subr.mxu0 0.0
    %668 = vmatpush1.xpose.msra.mxu0 0.0
    %669 = vmatprep.subr.mxu0 0.0
    %670 = vmatpush1.xpose.msra.mxu0 0.0
    %671 = vmatprep.subr.mxu0 0.0
    %672 = vmatpush1.xpose.msra.mxu0 0.0
    %673 = vmatprep.subr.mxu0 0.0
    %674 = vmatpush1.xpose.msra.mxu0 0.0
    %675 = vmatprep.subr.mxu0 0.0
    %676 = vmatpush1.xpose.msra.mxu0 0.0
    %677 = vmatprep.subr.mxu0 0.0
    %678 = vmatpush1.xpose.msra.mxu0 0.0
    %679 = vmatprep.subr.mxu0 0.0
    %680 = vmatpush1.xpose.msra.mxu0 0.0
    %681 = vmatprep.subr.mxu0 0.0
    %682 = vmatpush1.xpose.msra.mxu0 0.0
    %683 = vmatprep.subr.mxu0 0.0
    %684 = vmatpush1.xpose.msra.mxu0 0.0
    %685 = vmatprep.subr.mxu0 0.0
    %686 = vmatpush1.xpose.msra.mxu0 0.0
    %687 = vmatprep.subr.mxu0 0.0
    %688 = vmatpush1.xpose.msra.mxu0 0.0
    %689 = vmatprep.subr.mxu0 0.0
    %690 = vmatpush1.xpose.msra.mxu0 0.0
    %691 = vmatprep.subr.mxu0 0.0
    %692 = vmatpush1.xpose.msra.mxu0 0.0
    %693 = vmatprep.subr.mxu0 0.0
    %694 = vmatpush1.xpose.msra.mxu0 0.0
    %695 = vmatprep.subr.mxu0 0.0
    %696 = vmatpush1.xpose.msra.mxu0 0.0
    %697 = vmatprep.subr.mxu0 0.0
    %698 = vmatpush1.xpose.msra.mxu0 0.0
    %699 = vmatprep.subr.mxu0 0.0
    %700 = vmatpush1.xpose.msra.mxu0 0.0
    %701 = vmatprep.subr.mxu0 0.0
    %702 = vmatpush1.xpose.msra.mxu0 0.0
    %703 = vmatprep.subr.mxu0 0.0
    %704 = vmatpush1.xpose.msra.mxu0 0.0
    %705 = vmatprep.subr.mxu0 0.0
    %706 = vmatpush1.xpose.msra.mxu0 0.0
    %707 = vmatprep.subr.mxu0 0.0
    %708 = vmatpush1.xpose.msra.mxu0 0.0
    %709 = vmatprep.subr.mxu0 0.0
    %710 = vmatpush1.xpose.msra.mxu0 0.0
    %711 = vmatprep.subr.mxu0 0.0
    %712 = vmatpush1.xpose.msra.mxu0 0.0
    %713 = vmatprep.mubr.f32.mxu0 0.0
    %714 = vmatmul.mubr.f32.gmra.mrb[0].mxu0 %v53
    %v715 = vpop.f32.mrb[0].mxu0
    %v716 = vadd.f32 0.0, %v715
    %v717 = vpop.f32.mrb[0].mxu0
    %718 = vdwg.mxu0
    %v720 = vrot.slane %v212, 7
    %v723 = vrot.slane %v296, 6
    %v726 = vrot.slane %v380, 5
    %v729 = vrot.slane %v464, 4
    %v732 = vrot.slane %v548, 3
    %v735 = vrot.slane %v632, 2
    %v738 = vrot.slane %v716, 1
    %vm740 = vcmask 1040384
    %v741 = vsel %vm740, %v128, %v720
    %vm742 = vcmask 1041408
    %v743 = vsel %vm742, %v741, %v723
    %vm744 = vcmask 1042432
    %v745 = vsel %vm744, %v743, %v726
    %vm746 = vcmask 1043456
    %v747 = vsel %vm746, %v745, %v729
    %vm748 = vcmask 1044480
    %v749 = vsel %vm748, %v747, %v732
    %vm750 = vcmask 1045504
    %v751 = vsel %vm750, %v749, %v735
    %vm752 = vcmask 1046528
    %v753 = vsel %vm752, %v751, %v738
    %v754 = vadd.f32 %v753, 1.0
    %v755 = vrcp.pop %v754
    %v756 = vmul.f32 %v754, %v755
    %v757 = vsub.f32 2.0, %v756
    %v758 = vmul.f32 %v755, %v757
    %vm759 = vcmask 130048
    %760 = vst.msk [vmem:[#allocation7] sm:$0xff] %vm759, %v758
    %p761 = scmp.eq.s32.totalorder 0, 0
    // Predicated region
    $region18: #{tpu_custom_call.1} parent=1 // pred_check
      %p762 = pneg %p761
    $region19: #{tpu_custom_call.1} parent=1 // pred_check_branch
      %764 = sbr.rel (%p762) target = $region21
    $region20: #{tpu_custom_call.1} parent=1 // pred_region
      %vm765 = vcmask 7168
      %766 = vst.msk [vmem:[%s3] sm:$0xff] %vm765, 0.0
    $region21: #{tpu_custom_call.1} parent=1 // pred_fallthru
      _
    %v767 = vld [vmem:[%s3] sm:$0xff]
    %v768 = vsel %vm759, %v758, 0.0
    %769 = vadd.xlane.f32.xlu0 %v768
    %v770 = vpop.xlane.xlu0 %769
    %v771 = vadd.f32 %v767, %v770
    %vm772 = vcmask 7168
    %773 = vst.msk [vmem:[%s3] sm:$0xff] %vm772, %v771
    // Predicated region
    $region22: #{tpu_custom_call.1} parent=1 // pred_check
      _
    $region23: #{tpu_custom_call.1} parent=1 // pred_check_branch
      %775 = sbr.rel (0) target = $region25
    $region24: #{tpu_custom_call.1} parent=1 // pred_region
      %s777 = ssub.s32 128, 128
      %778 = vsyncadd [#allocation4], %s777
      %s780 = sshll.u32 [#allocation7], 4
      %s781 = int_to_ptr.vmem [resolvable:$true] %s780
      %783 = dma.vmem_to_hbm [thread:$0]  %s781, 128, %s2, [#allocation4]
    $region25: #{tpu_custom_call.1} parent=1 // pred_fallthru
      _
    // Predicated region
    $region26: #{tpu_custom_call.1} parent=1 // pred_check
      _
    $region27: #{tpu_custom_call.1} parent=1 // pred_check_branch
      %785 = sbr.rel (0) target = $region29
    $region28: #{tpu_custom_call.1} parent=1 // pred_region
      _
    $region29: #{tpu_custom_call.1} parent=1 // pred_fallthru
      _
    // Predicated region
    $region30: #{tpu_custom_call.1} parent=1 // pred_check
      _
    $region31: #{tpu_custom_call.1} parent=1 // pred_check_branch
      %787 = sbr.rel (0) target = $region33
    $region32: #{tpu_custom_call.1} parent=1 // pred_region
      %788 = dma.done [#allocation4], 128
    $region33: #{tpu_custom_call.1} parent=1 // pred_fallthru
      _
    // Predicated region
    $region34: #{tpu_custom_call.1} parent=1 // pred_check
      _
    $region35: #{tpu_custom_call.1} parent=1 // pred_check_branch
      %790 = sbr.rel (0) target = $region37
    $region36: #{tpu_custom_call.1} parent=1 // pred_region
      _
    $region37: #{tpu_custom_call.1} parent=1 // pred_fallthru
      _
    %791 = vsyncpa [#allocation3], 1
    %792 = vsyncpa [#allocation6], 1
    %793 = vsyncpa [#allocation4], 1

</llo_original>
